<compile_context>
chip_gen: v5e
topology: v5e:2x2
jax: 0.10.0
libtpu: 0.0.40
codegen_flags: <defaults>
</compile_context>

<pallas_src>
import jax
import jax.numpy as jnp
from jax.experimental import pallas as pl
from jax.experimental.pallas import tpu as pltpu


def _h_sigmoid_kernel(x_ref, o_ref):
    # h_sigmoid(x) = relu6(x + 3) / 6  (keep 1/6 as a multiply).
    x = x_ref[...].astype(jnp.float32)
    o_ref[...] = (jnp.clip(x + 3.0, 0.0, 6.0) * (1.0 / 6.0)).astype(o_ref.dtype)


_MIN_PALLAS_BYTES = 256 * 1024          # below this, plain XLA fusion is as fast
_MEGACORE_MIN_BYTES = 2 * 1024 * 1024   # only split the grid above this


def _block_bytes_per_buffer() -> int:
    """Generation-aware target block size (bytes per pipelined buffer)."""
    block_bytes = 4 * 1024 * 1024          # safe default (v7x: 64 MiB VMEM/TC)
    try:
        vmem_cap = pltpu.get_tpu_info().vmem_capacity_bytes
        if vmem_cap >= 100 * 1024 * 1024:  # v5e / v6e: 128 MiB VMEM
            block_bytes = 8 * 1024 * 1024
    except Exception:
        pass
    return block_bytes


def _h_sigmoid_jnp(x):
    xf = x.astype(jnp.float32)
    return (jnp.clip(xf + 3.0, 0.0, 6.0) * (1.0 / 6.0)).astype(x.dtype)


def h_sigmoid(x: jax.Array, *, donate: bool = False,
              force_pallas: bool = False) -> jax.Array:
    """Elementwise h_sigmoid: relu6(x + 3) / 6.  Any shape, float dtype."""
    orig_shape = x.shape
    dtype = x.dtype
    total = int(x.size)
    if total == 0:
        return x
    itemsize = jnp.dtype(dtype).itemsize

    # Tiny tensors: launch + per-step overhead dominates; use fused XLA.
    if not force_pallas and total * itemsize < _MIN_PALLAS_BYTES:
        return _h_sigmoid_jnp(x)

    # Widest lane dim that divides the element count (wide, unmasked vld/vst
    # streams).  If none divides, use 128 and finish the <128-element tail in
    # plain jnp -- no whole-array pad/slice passes.
    LANE = 128
    for cand in (1024, 512, 256, 128):
        if total % cand == 0:
            LANE = cand
            break
    tail = total % LANE
    bulk = total - tail

    x_flat = x.reshape(-1)
    if bulk == 0:
        return _h_sigmoid_jnp(x)

    rows = bulk // LANE
    block_bytes = _block_bytes_per_buffer()

    # Row tile: ~block_bytes per buffer, multiple of 8 (sublane alignment).
    tr_cap = max(8, (block_bytes // (LANE * itemsize)) // 8 * 8)
    tr = rows if rows <= tr_cap else tr_cap

    # Guarantee >= 2 grid steps on non-trivial inputs so ("parallel",) can
    # shard the grid across v7x's 2 TensorCores.  Harmless on 1-TC chips.
    if bulk * itemsize > _MEGACORE_MIN_BYTES and pl.cdiv(rows, tr) < 2:
        half_rows = -(-rows // 2)
        half_rows = -(-half_rows // 8) * 8
        tr = min(tr, max(8, half_rows))

    grid = (pl.cdiv(rows, tr),)  # partial last block handled by Pallas

    # VMEM budget from actual footprint: (in + out) x double-buffer + margin.
    vmem_limit = int(4 * tr * LANE * itemsize + (4 << 20))

    extra_kwargs = {}
    if donate:
        # In-place variant for donated activations (caller must donate x).
        extra_kwargs["input_output_aliases"] = {0: 0}

    bulk2d = (x_flat[:bulk] if tail else x_flat).reshape(rows, LANE)

    out2d = pl.pallas_call(
        _h_sigmoid_kernel,
        out_shape=jax.ShapeDtypeStruct((rows, LANE), dtype),
        grid_spec=pltpu.PrefetchScalarGridSpec(
            num_scalar_prefetch=0,
            grid=grid,
            in_specs=[pl.BlockSpec((tr, LANE), lambda i: (i, 0))],
            out_specs=pl.BlockSpec((tr, LANE), lambda i: (i, 0)),
        ),
        compiler_params=pltpu.CompilerParams(
            dimension_semantics=("parallel",),
            vmem_limit_bytes=vmem_limit,
        ),
        **extra_kwargs,
    )(bulk2d)

    out_flat = out2d.reshape(-1)
    if tail:
        out_flat = jnp.concatenate([out_flat, _h_sigmoid_jnp(x_flat[bulk:])])
    return out_flat.reshape(orig_shape)


if __name__ == "__main__":
    key = jax.random.PRNGKey(0)

    # 1) Spec shape (NCHW, as the PyTorch module would receive).  Small, so
    #    force the Pallas path to actually exercise the kernel.
    x0 = jax.random.normal(key, (2, 4, 16, 16), dtype=jnp.float32) * 4.0
    y0 = jax.block_until_ready(h_sigmoid(x0, force_pallas=True))
    assert y0.shape == x0.shape and y0.dtype == x0.dtype
    assert jnp.allclose(y0, _h_sigmoid_jnp(x0), atol=1e-5, rtol=1e-5)

    # 2) Ragged element count (exercises bulk-kernel + jnp-tail path and a
    #    block not equal to a lane multiple of the row tile).
    x1 = jax.random.normal(jax.random.fold_in(key, 1), (2, 3, 15, 17),
                           dtype=jnp.float32) * 4.0
    y1 = jax.block_until_ready(h_sigmoid(x1, force_pallas=True))
    assert y1.shape == x1.shape and y1.dtype == x1.dtype
    assert jnp.allclose(y1, _h_sigmoid_jnp(x1), atol=1e-5, rtol=1e-5)

    # 3) bf16 input (kernel computes in f32, stores bf16).
    x2 = (jax.random.normal(jax.random.fold_in(key, 2), (2, 4, 16, 16),
                            dtype=jnp.float32) * 4.0).astype(jnp.bfloat16)
    y2 = jax.block_until_ready(h_sigmoid(x2, force_pallas=True))
    assert y2.shape == x2.shape and y2.dtype == x2.dtype
    assert jnp.allclose(y2.astype(jnp.float32),
                        _h_sigmoid_jnp(x2).astype(jnp.float32),
                        atol=1e-2, rtol=1e-2)

    # 4) Larger tensor through the default (non-forced) Pallas path, with a
    #    grid of >= 2 steps and a partial last block.
    x3 = jax.random.normal(jax.random.fold_in(key, 3), (8, 64, 56, 56),
                           dtype=jnp.float32) * 4.0
    y3 = jax.block_until_ready(h_sigmoid(x3))
    assert y3.shape == x3.shape and y3.dtype == x3.dtype
    assert jnp.allclose(y3, _h_sigmoid_jnp(x3), atol=1e-5, rtol=1e-5)

    print("KERNEL_OK")
</pallas_src>

<mosaic_0001>
module attributes {stable_mosaic.version = 11 : i64} {
  func.func @_h_sigmoid_kernel(%arg0: i32, %arg1: memref<2x1024xf32, #tpu.memory_space<vmem>>, %arg2: memref<2x1024xf32, #tpu.memory_space<vmem>>) attributes {dimension_semantics = [#tpu.dimension_semantics<parallel>], iteration_bounds = array<i64: 1>, scalar_prefetch = 0 : i64, scratch_operands = 0 : i64, tpu.core_type = #tpu.core_type<tc>, window_params = [{transform_indices = @transform_0, window_bounds = array<i64: 2, 1024>}, {transform_indices = @transform_1, window_bounds = array<i64: 2, 1024>}]} {
    %c0 = arith.constant 0 : index
    %c0_0 = arith.constant 0 : index
    %0 = vector.load %arg1[%c0, %c0_0] : memref<2x1024xf32, #tpu.memory_space<vmem>>, vector<2x1024xf32>
    %cst = arith.constant 3.000000e+00 : f32
    %1 = vector.broadcast %cst : f32 to vector<2x1024xf32>
    %2 = arith.addf %0, %1 : vector<2x1024xf32>
    %cst_1 = arith.constant 0.000000e+00 : f32
    %cst_2 = arith.constant 6.000000e+00 : f32
    %3 = vector.broadcast %cst_1 : f32 to vector<2x1024xf32>
    %4 = arith.maximumf %3, %2 : vector<2x1024xf32>
    %5 = vector.broadcast %cst_2 : f32 to vector<2x1024xf32>
    %6 = arith.minimumf %5, %4 : vector<2x1024xf32>
    %cst_3 = arith.constant 0.166666672 : f32
    %7 = vector.broadcast %cst_3 : f32 to vector<2x1024xf32>
    %8 = arith.mulf %6, %7 : vector<2x1024xf32>
    %c0_4 = arith.constant 0 : index
    %c0_5 = arith.constant 0 : index
    %9 = vector.load %arg2[%c0_4, %c0_5] : memref<2x1024xf32, #tpu.memory_space<vmem>>, vector<2x1024xf32>
    tpu.vector_store %arg2[%c0_4, %c0_5], %8 {strides = array<i32>} : memref<2x1024xf32, #tpu.memory_space<vmem>>, vector<2x1024xf32>,
    return
  }
  func.func @transform_0(%arg0: i32) -> (i32, i32) {
    %c0_i32 = arith.constant 0 : i32
    %c0_i32_0 = arith.constant 0 : i32
    return %arg0, %c0_i32 : i32, i32
  }
  func.func @transform_1(%arg0: i32) -> (i32, i32) {
    %c0_i32 = arith.constant 0 : i32
    %c0_i32_0 = arith.constant 0 : i32
    return %arg0, %c0_i32 : i32, i32
  }
}

</mosaic_0001>

<llo_original>
// kernel: tpu_custom_call.1
$region0: #{tpu_custom_call.1}
  #allocation0 [shape = 'u32[]', space=smem, size = 0x4, offset = 0x4, fixed_abs, tag = 'smem constant byte address 0x4 - core index']
  #allocation1 [shape = 'u32[72,128]{1,0:T(1,128)}', space=vmem, size = 0x9000, scoped, tag = 'internal scratch']
  %s0 = inlined_call_operand.hbm [shape: f32[2,1024], index: 0, kind: input, shape index: {}]
  %s1 = inlined_call_operand.hbm [shape: f32[2,1024], index: 1, kind: output, shape index: {}]
  %s2 = sld [smem:[#allocation0]]
  $region18: #{tpu_custom_call.1} parent=0
    _
  %s4 = ssub.s32 1, %s2
  %s5 = scalar_select 0, %s4, %s2
  $region1: #{tpu_custom_call.1} parent=0
    #allocation2 [shape = 'u8[8192]{0}', space=vmem, size = 0x2000, scoped, tag = 'input window, operand 0, single buffered']
    #allocation3 [shape = 's32[1]{0}', space=sflag, size = 0x4, scoped, tag = 'scoped memory for tpu_custom_call.1']
    #allocation4 [shape = 's32[1]{0}', space=sflag, size = 0x4, scoped, tag = 'scoped memory for tpu_custom_call.1']
    #allocation5 [shape = 'u8[8192]{0}', space=vmem, size = 0x2000, scoped, tag = 'output window, operand 0, single buffered']
    %6 = vsyncpa [#allocation3], 0
    %7 = vsyncpa [#allocation4], 0
    // Predicated region
    $region2: #{tpu_custom_call.1} parent=1 // pred_check
      _
    $region3: #{tpu_custom_call.1} parent=1 // pred_check_branch
      %9 = sbr.rel (0) target = $region5
    $region4: #{tpu_custom_call.1} parent=1 // pred_region
      %11 = vsyncadd [#allocation3], 0
      %s13 = sshll.u32 %s0, 4
      %s14 = int_to_ptr.hbm [resolvable:$true] %s13
      %s15 = sshll.u32 [#allocation2], 4
      %s16 = int_to_ptr.vmem [resolvable:$true] %s15
      %18 = dma.hbm_to_vmem [thread:$0]  %s14, 256, %s16, [#allocation3]
    $region5: #{tpu_custom_call.1} parent=1 // pred_fallthru
      _
    // Predicated region
    $region6: #{tpu_custom_call.1} parent=1 // pred_check
      _
    $region7: #{tpu_custom_call.1} parent=1 // pred_check_branch
      %20 = sbr.rel (0) target = $region9
    $region8: #{tpu_custom_call.1} parent=1 // pred_region
      %22 = dma.done [#allocation3], 256
    $region9: #{tpu_custom_call.1} parent=1 // pred_fallthru
      _
    %v23 = vld [vmem:[#allocation2] sm:$0xff]
    %v24 = vld [vmem:[#allocation2 + $0x8] sm:$0xff]
    %v25 = vadd.f32 %v23, 3.0
    %v26 = vadd.f32 %v24, 3.0
    %v27 = vmax.f32 %v25, 0.0
    %v28 = vmax.f32 %v26, 0.0
    %v29 = vmin.f32 %v27, 6.0
    %v30 = vmin.f32 %v28, 6.0
    %v31 = vmul.f32 %v29, 0.16666667
    %v32 = vmul.f32 %v30, 0.16666667
    %33 = vst [vmem:[#allocation5] sm:$0xff] %v31
    %34 = vst [vmem:[#allocation5 + $0x8] sm:$0xff] %v32
    // Predicated region
    $region10: #{tpu_custom_call.1} parent=1 // pred_check
      _
    $region11: #{tpu_custom_call.1} parent=1 // pred_check_branch
      %36 = sbr.rel (0) target = $region13
    $region12: #{tpu_custom_call.1} parent=1 // pred_region
      %38 = vsyncadd [#allocation4], 0
      %s40 = sshll.u32 [#allocation5], 4
      %s41 = int_to_ptr.vmem [resolvable:$true] %s40
      %s42 = sshll.u32 %s1, 4
      %s43 = int_to_ptr.hbm [resolvable:$true] %s42
      %45 = dma.vmem_to_hbm [thread:$0]  %s41, 256, %s43, [#allocation4]
    $region13: #{tpu_custom_call.1} parent=1 // pred_fallthru
      _
    // Predicated region
    $region14: #{tpu_custom_call.1} parent=1 // pred_check
      _
    $region15: #{tpu_custom_call.1} parent=1 // pred_check_branch
      %47 = sbr.rel (0) target = $region17
    $region16: #{tpu_custom_call.1} parent=1 // pred_region
      %49 = dma.done [#allocation4], 256
    $region17: #{tpu_custom_call.1} parent=1 // pred_fallthru
      _
    %50 = vsyncpa [#allocation3], 1
    %51 = vsyncpa [#allocation4], 1

</llo_original>
